<compile_context>
chip_gen: v6e
topology: v6e:2x2x1
jax: 0.10.0
libtpu: 0.0.40
codegen_flags: <defaults>
</compile_context>

<pallas_src>
import functools

import jax
import jax.numpy as jnp
from jax.experimental import pallas as pl
from jax.experimental.pallas import tpu as pltpu


def _round_up(x, m):
    return ((x + m - 1) // m) * m


def _pad_dim(d):
    """Per-layer lane padding: >=128; 256-aligned once above 128 (v6e/v7x MXU)."""
    p = _round_up(d, 128)
    if p > 128:
        p = _round_up(p, 256)
    return p


def _mlp_kernel(x_ref, w1_ref, w2_ref, w3_ref, wo_ref, bh_ref, bo_ref, out_ref,
                *, bf16_act):
    """One batch-tile of the fused MLP forward, entirely in VMEM.

    x_ref:   [tb, Pf]   input tile (weight dtype)
    w1_ref:  [Pf, Ph]   padded weights (zero padding)
    w2_ref:  [Ph, Ph]
    w3_ref:  [Ph, Ph]
    wo_ref:  [Ph, Po]
    bh_ref:  [3, Ph]    f32 hidden-layer biases (zero padding)
    bo_ref:  [1, Po]    f32 output bias; padded lanes are -1e9 (softmax mask)
    out_ref: [tb, Po]   softmax probabilities (real columns are [:n_options])
    """
    cdt = w1_ref.dtype                               # MXU input dtype
    act_dt = jnp.bfloat16 if bf16_act else jnp.float32

    x = x_ref[...]
    h = jnp.tanh((jnp.dot(x, w1_ref[...], preferred_element_type=jnp.float32)
                  + bh_ref[0:1, :]).astype(act_dt))
    h = jnp.tanh((jnp.dot(h.astype(cdt), w2_ref[...],
                          preferred_element_type=jnp.float32)
                  + bh_ref[1:2, :]).astype(act_dt))
    h = jnp.tanh((jnp.dot(h.astype(cdt), w3_ref[...],
                          preferred_element_type=jnp.float32)
                  + bh_ref[2:3, :]).astype(act_dt))
    logits = (jnp.dot(h.astype(cdt), wo_ref[...],
                      preferred_element_type=jnp.float32)
              + bo_ref[...])                         # f32; padded lanes = -1e9

    # Numerically-stable softmax over the padded option lanes (f32).  Padded
    # lanes carry logit -1e9 -> exp underflows to 0 and drops out of the sum.
    m = jnp.max(logits, axis=-1, keepdims=True)
    e = jnp.exp(logits - m)
    denom = jnp.sum(e, axis=-1, keepdims=True)
    out_ref[...] = (e * pl.reciprocal(denom, approx=True)).astype(out_ref.dtype)


def mlp_forward(x, params, *, batch_tile=None, weight_dtype=jnp.bfloat16,
                out_dtype=None):
    """Run the MLP forward pass as a single fused Pallas TPU kernel.

    Args:
      x:       [N, n_features] float32
      params:  dict w1,b1,w2,b2,w3,b3,wo,bo with weights stored as [in, out]
               (i.e. already transposed vs. torch.nn.Linear.weight).
      batch_tile:   rows of x per grid step (default 1024; rounded to the
                    sublane multiple and capped so the grid has >= 2 steps).
      weight_dtype: dtype fed to the MXU (bf16 default; f32 for bit-accuracy /
                    the v5e-friendly all-f32 path).
      out_dtype:    output dtype (defaults to weight_dtype: bf16 output halves
                    the dominant HBM write; pass jnp.float32 for exact f32).

    Returns: [N, n_options] softmax probabilities in `out_dtype`.
    """
    n, n_features = x.shape
    n_hidden = params["w1"].shape[1]
    n_options = params["wo"].shape[1]

    if out_dtype is None:
        out_dtype = weight_dtype

    Pf = _pad_dim(n_features)
    Ph = _pad_dim(n_hidden)
    Po = _pad_dim(n_options)

    bf16_act = jnp.dtype(weight_dtype) == jnp.dtype(jnp.bfloat16)
    sub = 16 if bf16_act else 8                       # bf16 vreg = [16,128]

    if batch_tile is None:
        batch_tile = 1024
    tb = _round_up(batch_tile, sub)
    tb = min(tb, _round_up(n, sub))                   # never exceed the batch
    if n >= 2 * sub:                                  # >=2 steps -> both v7x TCs
        tb = min(tb, _round_up((n + 1) // 2, sub))
    tb = max(tb, sub)
    n_pad = _round_up(n, tb)

    # --- pack / pad parameters (done once, outside the kernel) -------------
    def pad_w(w, pi, po):
        fi, fo = w.shape
        return jnp.zeros((pi, po), weight_dtype).at[:fi, :fo].set(
            w.astype(weight_dtype))

    w1 = pad_w(params["w1"], Pf, Ph)
    w2 = pad_w(params["w2"], Ph, Ph)
    w3 = pad_w(params["w3"], Ph, Ph)
    wo = pad_w(params["wo"], Ph, Po)

    def pad_b(b, width, fill):
        return jnp.full((width,), fill, jnp.float32).at[: b.shape[0]].set(
            b.astype(jnp.float32))

    bh = jnp.stack([pad_b(params["b1"], Ph, 0.0),
                    pad_b(params["b2"], Ph, 0.0),
                    pad_b(params["b3"], Ph, 0.0)])            # [3, Ph]
    bo = pad_b(params["bo"], Po, -1e9)[None, :]               # [1, Po]

    # Pad x: rows to a multiple of tb, features to Pf lanes; cast for the MXU.
    x_pad = jnp.zeros((n_pad, Pf), weight_dtype).at[:n, :n_features].set(
        x.astype(weight_dtype))

    grid = (n_pad // tb,)
    wsz = jnp.dtype(weight_dtype).itemsize
    osz = jnp.dtype(out_dtype).itemsize

    weight_bytes = (Pf * Ph + 2 * Ph * Ph + Ph * Po) * wsz
    bias_bytes = (3 * Ph + Po) * 4

    cost = pl.CostEstimate(
        flops=int(2 * n_pad * (Pf * Ph + 2 * Ph * Ph + Ph * Po)),
        transcendentals=int(n_pad * (3 * Ph + Po)),   # 3 tanh layers + exp
        bytes_accessed=int(n_pad * Pf * wsz            # x stream
                           + weight_bytes + bias_bytes  # resident params
                           + n_pad * Po * osz))         # output stream

    # VMEM budget from the actual buffers (v7x physical ceiling is 64 MiB):
    # double-buffered x / out streams, (double-buffered) resident params,
    # plus f32 intermediates for one tile.  2x margin, clamped to [16, 64] MiB.
    need = (2 * tb * Pf * wsz + 2 * tb * Po * osz
            + 2 * (weight_bytes + bias_bytes)
            + 4 * tb * max(Pf, Ph, Po) * 4)
    vmem_limit = int(min(max(2 * need, 16 << 20), 64 << 20))

    out = pl.pallas_call(
        functools.partial(_mlp_kernel, bf16_act=bf16_act),
        out_shape=jax.ShapeDtypeStruct((n_pad, Po), out_dtype),
        grid_spec=pltpu.PrefetchScalarGridSpec(
            num_scalar_prefetch=0,
            grid=grid,
            in_specs=[
                pl.BlockSpec((tb, Pf), lambda i: (i, 0)),     # x (streamed)
                pl.BlockSpec((Pf, Ph), lambda i: (0, 0)),     # w1 (resident)
                pl.BlockSpec((Ph, Ph), lambda i: (0, 0)),     # w2 (resident)
                pl.BlockSpec((Ph, Ph), lambda i: (0, 0)),     # w3 (resident)
                pl.BlockSpec((Ph, Po), lambda i: (0, 0)),     # wo (resident)
                pl.BlockSpec((3, Ph), lambda i: (0, 0)),      # hidden biases
                pl.BlockSpec((1, Po), lambda i: (0, 0)),      # output bias
            ],
            out_specs=pl.BlockSpec((tb, Po), lambda i: (i, 0)),  # lane-dense
        ),
        compiler_params=pltpu.CompilerParams(
            dimension_semantics=("parallel",),
            vmem_limit_bytes=vmem_limit),
        cost_estimate=cost,
    )(x_pad, w1, w2, w3, wo, bh, bo)

    return out[:n, :n_options]


def init_params(key, n_features, n_hidden, n_options):
    """Deterministic init mimicking torch.nn.Linear's U(-1/sqrt(fan_in), +...)."""
    keys = jax.random.split(key, 8)

    def linear(kw, kb, fan_in, fan_out):
        bound = 1.0 / jnp.sqrt(fan_in)
        w = jax.random.uniform(kw, (fan_in, fan_out), jnp.float32, -bound, bound)
        b = jax.random.uniform(kb, (fan_out,), jnp.float32, -bound, bound)
        return w, b

    w1, b1 = linear(keys[0], keys[1], n_features, n_hidden)
    w2, b2 = linear(keys[2], keys[3], n_hidden, n_hidden)
    w3, b3 = linear(keys[4], keys[5], n_hidden, n_hidden)
    wo, bo = linear(keys[6], keys[7], n_hidden, n_options)
    return dict(w1=w1, b1=b1, w2=w2, b2=b2, w3=w3, b3=b3, wo=wo, bo=bo)


def mlp_forward_ref(x, p):
    """Pure-JAX f32 reference for correctness checking."""
    h = jnp.tanh(x @ p["w1"] + p["b1"])
    h = jnp.tanh(h @ p["w2"] + p["b2"])
    h = jnp.tanh(h @ p["w3"] + p["b3"])
    logits = h @ p["wo"] + p["bo"]
    return jax.nn.softmax(logits, axis=1)


if __name__ == "__main__":
    # Small shapes consistent with the module (choice prediction MLP).
    n_features, n_options, n_hidden = 8, 4, 32
    batch = 200            # not a multiple of the tile -> exercises row padding

    key = jax.random.PRNGKey(0)
    k_params, k_x = jax.random.split(key)
    params = init_params(k_params, n_features, n_hidden, n_options)
    x = jax.random.normal(k_x, (batch, n_features), jnp.float32)

    ref = mlp_forward_ref(x, params)

    # f32 path (near-exact; only the approx reciprocal differs slightly).
    probs_f32 = jax.block_until_ready(
        mlp_forward(x, params, batch_tile=64, weight_dtype=jnp.float32,
                    out_dtype=jnp.float32))
    assert probs_f32.shape == (batch, n_options)
    assert jnp.allclose(probs_f32, ref, atol=5e-3, rtol=1e-3)
    assert jnp.allclose(jnp.sum(probs_f32, axis=1), 1.0, atol=5e-3)

    # Default path: bf16 weights / activations / output, default (large) tile,
    # grid capped so there are >= 2 parallel steps (v7x megacore).
    probs_bf16 = jax.block_until_ready(mlp_forward(x, params))
    assert probs_bf16.shape == (batch, n_options)
    assert probs_bf16.dtype == jnp.bfloat16
    p = probs_bf16.astype(jnp.float32)
    assert jnp.allclose(p, ref, atol=5e-2, rtol=5e-2)
    assert jnp.allclose(jnp.sum(p, axis=1), 1.0, atol=2e-2)

    print("KERNEL_OK")
</pallas_src>

<mosaic_0001>
module attributes {stable_mosaic.version = 11 : i64} {
  func.func @_mlp_kernel(%arg0: i32, %arg1: memref<64x128xf32, #tpu.memory_space<vmem>>, %arg2: memref<128x128xf32, #tpu.memory_space<vmem>>, %arg3: memref<128x128xf32, #tpu.memory_space<vmem>>, %arg4: memref<128x128xf32, #tpu.memory_space<vmem>>, %arg5: memref<128x128xf32, #tpu.memory_space<vmem>>, %arg6: memref<3x128xf32, #tpu.memory_space<vmem>>, %arg7: memref<1x128xf32, #tpu.memory_space<vmem>>, %arg8: memref<64x128xf32, #tpu.memory_space<vmem>>) attributes {dimension_semantics = [#tpu.dimension_semantics<parallel>], iteration_bounds = array<i64: 4>, scalar_prefetch = 0 : i64, scratch_operands = 0 : i64, tpu.core_type = #tpu.core_type<tc>, window_params = [{transform_indices = @transform_0, window_bounds = array<i64: 64, 128>}, {pipeline_mode = #tpu.pipeline_mode<synchronous>, transform_indices = @transform_1, window_bounds = array<i64: 128, 128>}, {pipeline_mode = #tpu.pipeline_mode<synchronous>, transform_indices = @transform_2, window_bounds = array<i64: 128, 128>}, {pipeline_mode = #tpu.pipeline_mode<synchronous>, transform_indices = @transform_3, window_bounds = array<i64: 128, 128>}, {pipeline_mode = #tpu.pipeline_mode<synchronous>, transform_indices = @transform_4, window_bounds = array<i64: 128, 128>}, {pipeline_mode = #tpu.pipeline_mode<synchronous>, transform_indices = @transform_5, window_bounds = array<i64: 3, 128>}, {pipeline_mode = #tpu.pipeline_mode<synchronous>, transform_indices = @transform_6, window_bounds = array<i64: 1, 128>}, {transform_indices = @transform_7, window_bounds = array<i64: 64, 128>}]} {
    %c0 = arith.constant 0 : index
    %c0_0 = arith.constant 0 : index
    %0 = vector.load %arg1[%c0, %c0_0] : memref<64x128xf32, #tpu.memory_space<vmem>>, vector<64x128xf32>
    %c0_1 = arith.constant 0 : index
    %c0_2 = arith.constant 0 : index
    %1 = vector.load %arg2[%c0_1, %c0_2] : memref<128x128xf32, #tpu.memory_space<vmem>>, vector<128x128xf32>
    %cst = arith.constant dense<0.000000e+00> : vector<64x128xf32>
    %2 = tpu.matmul %0, %1, %cst {dimension_numbers = #tpu.dot_dimension_numbers<[1], [0], [0], [1], [0, 0, 1, 1], [], []>} : vector<64x128xf32>, vector<128x128xf32>, vector<64x128xf32> -> vector<64x128xf32>
    %c0_3 = arith.constant 0 : index
    %c0_4 = arith.constant 0 : index
    %3 = vector.load %arg6[%c0_3, %c0_4] : memref<3x128xf32, #tpu.memory_space<vmem>>, vector<1x128xf32>
    %4 = vector.broadcast %3 : vector<1x128xf32> to vector<64x128xf32>
    %5 = arith.addf %2, %4 : vector<64x128xf32>
    %6 = math.tanh %5 : vector<64x128xf32>
    %c0_5 = arith.constant 0 : index
    %c0_6 = arith.constant 0 : index
    %7 = vector.load %arg3[%c0_5, %c0_6] : memref<128x128xf32, #tpu.memory_space<vmem>>, vector<128x128xf32>
    %cst_7 = arith.constant dense<0.000000e+00> : vector<64x128xf32>
    %8 = tpu.matmul %6, %7, %cst_7 {dimension_numbers = #tpu.dot_dimension_numbers<[1], [0], [0], [1], [0, 0, 1, 1], [], []>} : vector<64x128xf32>, vector<128x128xf32>, vector<64x128xf32> -> vector<64x128xf32>
    %c1 = arith.constant 1 : index
    %c0_8 = arith.constant 0 : index
    %9 = vector.load %arg6[%c1, %c0_8] : memref<3x128xf32, #tpu.memory_space<vmem>>, vector<1x128xf32>
    %10 = vector.broadcast %9 : vector<1x128xf32> to vector<64x128xf32>
    %11 = arith.addf %8, %10 : vector<64x128xf32>
    %12 = math.tanh %11 : vector<64x128xf32>
    %c0_9 = arith.constant 0 : index
    %c0_10 = arith.constant 0 : index
    %13 = vector.load %arg4[%c0_9, %c0_10] : memref<128x128xf32, #tpu.memory_space<vmem>>, vector<128x128xf32>
    %cst_11 = arith.constant dense<0.000000e+00> : vector<64x128xf32>
    %14 = tpu.matmul %12, %13, %cst_11 {dimension_numbers = #tpu.dot_dimension_numbers<[1], [0], [0], [1], [0, 0, 1, 1], [], []>} : vector<64x128xf32>, vector<128x128xf32>, vector<64x128xf32> -> vector<64x128xf32>
    %c2 = arith.constant 2 : index
    %c0_12 = arith.constant 0 : index
    %15 = vector.load %arg6[%c2, %c0_12] : memref<3x128xf32, #tpu.memory_space<vmem>>, vector<1x128xf32>
    %16 = vector.broadcast %15 : vector<1x128xf32> to vector<64x128xf32>
    %17 = arith.addf %14, %16 : vector<64x128xf32>
    %18 = math.tanh %17 : vector<64x128xf32>
    %c0_13 = arith.constant 0 : index
    %c0_14 = arith.constant 0 : index
    %19 = vector.load %arg5[%c0_13, %c0_14] : memref<128x128xf32, #tpu.memory_space<vmem>>, vector<128x128xf32>
    %cst_15 = arith.constant dense<0.000000e+00> : vector<64x128xf32>
    %20 = tpu.matmul %18, %19, %cst_15 {dimension_numbers = #tpu.dot_dimension_numbers<[1], [0], [0], [1], [0, 0, 1, 1], [], []>} : vector<64x128xf32>, vector<128x128xf32>, vector<64x128xf32> -> vector<64x128xf32>
    %c0_16 = arith.constant 0 : index
    %c0_17 = arith.constant 0 : index
    %21 = vector.load %arg7[%c0_16, %c0_17] : memref<1x128xf32, #tpu.memory_space<vmem>>, vector<1x128xf32>
    %22 = vector.broadcast %21 : vector<1x128xf32> to vector<64x128xf32>
    %23 = arith.addf %20, %22 : vector<64x128xf32>
    %cst_18 = arith.constant dense<0xFF800000> : vector<64xf32>
    %24 = vector.multi_reduction <maximumf>, %23, %cst_18 [1] : vector<64x128xf32> to vector<64xf32>
    %25 = vector.shape_cast %24 : vector<64xf32> to vector<64x1xf32>
    %26 = vector.broadcast %25 : vector<64x1xf32> to vector<64x128xf32>
    %27 = arith.subf %23, %26 : vector<64x128xf32>
    %28 = math.exp %27 : vector<64x128xf32>
    %cst_19 = arith.constant dense<0.000000e+00> : vector<64xf32>
    %29 = vector.multi_reduction <add>, %28, %cst_19 [1] : vector<64x128xf32> to vector<64xf32>
    %30 = vector.shape_cast %29 : vector<64xf32> to vector<64x1xf32>
    %31 = tpu.reciprocal %30 {approx = true} : vector<64x1xf32> -> vector<64x1xf32>
    %32 = vector.broadcast %31 : vector<64x1xf32> to vector<64x128xf32>
    %33 = arith.mulf %28, %32 : vector<64x128xf32>
    %c0_20 = arith.constant 0 : index
    %c0_21 = arith.constant 0 : index
    %34 = vector.load %arg8[%c0_20, %c0_21] : memref<64x128xf32, #tpu.memory_space<vmem>>, vector<64x128xf32>
    tpu.vector_store %arg8[%c0_20, %c0_21], %33 {strides = array<i32>} : memref<64x128xf32, #tpu.memory_space<vmem>>, vector<64x128xf32>,
    return
  }
  func.func @transform_0(%arg0: i32) -> (i32, i32) {
    %c0_i32 = arith.constant 0 : i32
    %c0_i32_0 = arith.constant 0 : i32
    return %arg0, %c0_i32 : i32, i32
  }
  func.func @transform_1(%arg0: i32) -> (i32, i32) {
    %c0_i32 = arith.constant 0 : i32
    %c0_i32_0 = arith.constant 0 : i32
    %c0_i32_1 = arith.constant 0 : i32
    return %c0_i32, %c0_i32_0 : i32, i32
  }
  func.func @transform_2(%arg0: i32) -> (i32, i32) {
    %c0_i32 = arith.constant 0 : i32
    %c0_i32_0 = arith.constant 0 : i32
    %c0_i32_1 = arith.constant 0 : i32
    return %c0_i32, %c0_i32_0 : i32, i32
  }
  func.func @transform_3(%arg0: i32) -> (i32, i32) {
    %c0_i32 = arith.constant 0 : i32
    %c0_i32_0 = arith.constant 0 : i32
    %c0_i32_1 = arith.constant 0 : i32
    return %c0_i32, %c0_i32_0 : i32, i32
  }
  func.func @transform_4(%arg0: i32) -> (i32, i32) {
    %c0_i32 = arith.constant 0 : i32
    %c0_i32_0 = arith.constant 0 : i32
    %c0_i32_1 = arith.constant 0 : i32
    return %c0_i32, %c0_i32_0 : i32, i32
  }
  func.func @transform_5(%arg0: i32) -> (i32, i32) {
    %c0_i32 = arith.constant 0 : i32
    %c0_i32_0 = arith.constant 0 : i32
    %c0_i32_1 = arith.constant 0 : i32
    return %c0_i32, %c0_i32_0 : i32, i32
  }
  func.func @transform_6(%arg0: i32) -> (i32, i32) {
    %c0_i32 = arith.constant 0 : i32
    %c0_i32_0 = arith.constant 0 : i32
    %c0_i32_1 = arith.constant 0 : i32
    return %c0_i32, %c0_i32_0 : i32, i32
  }
  func.func @transform_7(%arg0: i32) -> (i32, i32) {
    %c0_i32 = arith.constant 0 : i32
    %c0_i32_0 = arith.constant 0 : i32
    return %arg0, %c0_i32 : i32, i32
  }
}

</mosaic_0001>

<llo_original>
// kernel: tpu_custom_call.1
$region0: #{tpu_custom_call.1}
  #allocation0 [shape = 'u32[]', space=smem, size = 0x4, offset = 0x4, fixed_abs, tag = 'smem constant byte address 0x4 - core index']
  #allocation1 [shape = 'u32[144,128]{1,0:T(1,128)}', space=vmem, size = 0x12000, scoped, tag = 'internal scratch']
  %s0 = inlined_call_operand.hbm [shape: f32[256,128], index: 0, kind: input, shape index: {}]
  %s1 = inlined_call_operand.hbm [shape: f32[128,128], index: 1, kind: input, shape index: {}]
  %s2 = inlined_call_operand.hbm [shape: f32[128,128], index: 2, kind: input, shape index: {}]
  %s3 = inlined_call_operand.hbm [shape: f32[128,128], index: 3, kind: input, shape index: {}]
  %s4 = inlined_call_operand.hbm [shape: f32[128,128], index: 4, kind: input, shape index: {}]
  %s5 = inlined_call_operand.vmem [shape: f32[3,128], index: 5, kind: input, shape index: {}]
  %s6 = inlined_call_operand.vmem [shape: f32[1,128], index: 6, kind: input, shape index: {}]
  %s7 = inlined_call_operand.hbm [shape: f32[256,128], index: 7, kind: output, shape index: {}]
  %s8 = sld [smem:[#allocation0]]
  $region81: #{tpu_custom_call.1} parent=0
    _
  %s10 = ssub.s32 1, %s8
  %s11 = scalar_select 0, %s10, %s8
  $region1: #{tpu_custom_call.1} parent=0
    #allocation2 [shape = 'u8[65536]{0}', space=vmem, size = 0x10000, scoped, tag = 'input window, operand 0']
    #allocation3 [shape = 's32[2]{0}', space=sflag, size = 0x8, scoped, tag = 'scoped memory for tpu_custom_call.1']
    #allocation4 [shape = 's32[2]{0}', space=sflag, size = 0x8, scoped, tag = 'scoped memory for tpu_custom_call.1']
    #allocation5 [shape = 'u8[65536]{0}', space=vmem, size = 0x10000, scoped, tag = 'input window, operand 1, single buffered']
    #allocation6 [shape = 's32[1]{0}', space=sflag, size = 0x4, scoped, tag = 'scoped memory for tpu_custom_call.1']
    #allocation7 [shape = 'u8[65536]{0}', space=vmem, size = 0x10000, scoped, tag = 'input window, operand 2, single buffered']
    #allocation8 [shape = 'u8[65536]{0}', space=vmem, size = 0x10000, scoped, tag = 'input window, operand 3, single buffered']
    #allocation9 [shape = 's32[1]{0}', space=sflag, size = 0x4, scoped, tag = 'scoped memory for tpu_custom_call.1']
    #allocation10 [shape = 'u8[65536]{0}', space=vmem, size = 0x10000, scoped, tag = 'input window, operand 4, single buffered']
    #allocation11 [shape = 'u8[65536]{0}', space=vmem, size = 0x10000, scoped, tag = 'output window, operand 0']
    %12 = vsyncpa [#allocation3], 0
    %s13 = scalar_lea.sflag [#allocation3], 1
    %14 = vsyncpa %s13, 0
    %15 = vsyncpa [#allocation6], 0
    %16 = vsyncpa [#allocation9], 0
    %17 = vsyncpa [#allocation4], 0
    %s18 = scalar_lea.sflag [#allocation4], 1
    %19 = vsyncpa %s18, 0
    loop: start=0, step=1, limit=6
    $region2: #{tpu_custom_call.1} parent=1 // loop_pre_header
      _
    $region3: #{tpu_custom_call.1} parent=1 // loop_header
      %s21 = sphi 0, %s25
      %p22 = scmp.ge.s32.totalorder %s21, 6
      %s31 = sphi 0, %s33
      %s34 = sphi 0, %s31
      %s35 = sphi 0, %s34
      %s51 = sphi 0, %s35
      %s55 = sphi 0, %s55
      %s57 = sphi 0, %s55
      %s58 = sphi 0, %s57
      %s72 = sphi 0, %s58
      %s76 = sphi 0, %s76
      %s78 = sphi 0, %s76
      %s79 = sphi 0, %s78
      %s93 = sphi 0, %s79
      %s97 = sphi 0, %s97
      %s99 = sphi 0, %s97
      %s100 = sphi 0, %s99
      %s114 = sphi 0, %s100
      %s118 = sphi 0, %s118
      %s120 = sphi 0, %s118
      %s121 = sphi 0, %s120
      %s135 = sphi 0, %s121
      %s139 = sphi 0, %s139
      %s141 = sphi 0, %s139
      %s142 = sphi 0, %s141
      %s156 = sphi 0, %s142
      %s160 = sphi 0, %s160
      %s162 = sphi 0, %s160
      %s163 = sphi 0, %s162
      %s177 = sphi 0, %s163
      %s183 = sphi 0, %s185
      %s186 = sphi 0, %s183
      %s187 = sphi 0, %s186
      %s203 = sphi 0, %s187
    $region4: #{tpu_custom_call.1} parent=1 // loop_header_branch
      %24 = sbr.rel (%p22) target = $region8
    $region5: #{tpu_custom_call.1} parent=1 // loop_body
      %s26 = ssub.s32 %s21, 1
      %s27 = ssub.s32 %s21, 2
      %s28 = sadd.s32 %s21, 1
      %s29 = ssub.s32 %s21, %s28
      %p30 = scmp.eq.s32.totalorder %s29, 0
      %s32 = sadd.s32 %s31, 1
      %s33 = scalar_select %p30, %s31, %s32
      %p36 = pneg %p30
      %p37 = scmp.eq.s32.totalorder %s21, 3
      %p38 = por %p36, %p37
      %p39 = scmp.ne.s32.totalorder %s31, %s34
      %p40 = scmp.eq.s32.totalorder %s21, 0
      %p41 = por %p39, %p40
      %p42 = scmp.ne.s32.totalorder %s31, %s34
      %p43 = scmp.eq.s32.totalorder %s26, 3
      %p44 = por %p42, %p43
      %p45 = scmp.ne.s32.totalorder %s34, %s35
      %p46 = scmp.eq.s32.totalorder %s26, 0
      %p47 = por %p45, %p46
      %p48 = scmp.ne.s32.totalorder %s34, %s35
      %p49 = scmp.eq.s32.totalorder %s27, 3
      %p50 = por %p48, %p49
      %p52 = scmp.ne.s32.totalorder %s35, %s51
      %p53 = scmp.eq.s32.totalorder %s27, 0
      %p54 = por %p52, %p53
      %s56 = sadd.s32 %s55, 1
      %p59 = scmp.eq.s32.totalorder %s21, 3
      %p60 = scmp.ne.s32.totalorder %s55, %s57
      %p61 = scmp.eq.s32.totalorder %s21, 0
      %p62 = por %p60, %p61
      %p63 = scmp.ne.s32.totalorder %s55, %s57
      %p64 = scmp.eq.s32.totalorder %s26, 3
      %p65 = por %p63, %p64
      %p66 = scmp.ne.s32.totalorder %s57, %s58
      %p67 = scmp.eq.s32.totalorder %s26, 0
      %p68 = por %p66, %p67
      %p69 = scmp.ne.s32.totalorder %s57, %s58
      %p70 = scmp.eq.s32.totalorder %s27, 3
      %p71 = por %p69, %p70
      %p73 = scmp.ne.s32.totalorder %s58, %s72
      %p74 = scmp.eq.s32.totalorder %s27, 0
      %p75 = por %p73, %p74
      %s77 = sadd.s32 %s76, 1
      %p80 = scmp.eq.s32.totalorder %s21, 3
      %p81 = scmp.ne.s32.totalorder %s76, %s78
      %p82 = scmp.eq.s32.totalorder %s21, 0
      %p83 = por %p81, %p82
      %p84 = scmp.ne.s32.totalorder %s76, %s78
      %p85 = scmp.eq.s32.totalorder %s26, 3
      %p86 = por %p84, %p85
      %p87 = scmp.ne.s32.totalorder %s78, %s79
      %p88 = scmp.eq.s32.totalorder %s26, 0
      %p89 = por %p87, %p88
      %p90 = scmp.ne.s32.totalorder %s78, %s79
      %p91 = scmp.eq.s32.totalorder %s27, 3
      %p92 = por %p90, %p91
      %p94 = scmp.ne.s32.totalorder %s79, %s93
      %p95 = scmp.eq.s32.totalorder %s27, 0
      %p96 = por %p94, %p95
      %s98 = sadd.s32 %s97, 1
      %p101 = scmp.eq.s32.totalorder %s21, 3
      %p102 = scmp.ne.s32.totalorder %s97, %s99
      %p103 = scmp.eq.s32.totalorder %s21, 0
      %p104 = por %p102, %p103
      %p105 = scmp.ne.s32.totalorder %s97, %s99
      %p106 = scmp.eq.s32.totalorder %s26, 3
      %p107 = por %p105, %p106
      %p108 = scmp.ne.s32.totalorder %s99, %s100
      %p109 = scmp.eq.s32.totalorder %s26, 0
      %p110 = por %p108, %p109
      %p111 = scmp.ne.s32.totalorder %s99, %s100
      %p112 = scmp.eq.s32.totalorder %s27, 3
      %p113 = por %p111, %p112
      %p115 = scmp.ne.s32.totalorder %s100, %s114
      %p116 = scmp.eq.s32.totalorder %s27, 0
      %p117 = por %p115, %p116
      %s119 = sadd.s32 %s118, 1
      %p122 = scmp.eq.s32.totalorder %s21, 3
      %p123 = scmp.ne.s32.totalorder %s118, %s120
      %p124 = scmp.eq.s32.totalorder %s21, 0
      %p125 = por %p123, %p124
      %p126 = scmp.ne.s32.totalorder %s118, %s120
      %p127 = scmp.eq.s32.totalorder %s26, 3
      %p128 = por %p126, %p127
      %p129 = scmp.ne.s32.totalorder %s120, %s121
      %p130 = scmp.eq.s32.totalorder %s26, 0
      %p131 = por %p129, %p130
      %p132 = scmp.ne.s32.totalorder %s120, %s121
      %p133 = scmp.eq.s32.totalorder %s27, 3
      %p134 = por %p132, %p133
      %p136 = scmp.ne.s32.totalorder %s121, %s135
      %p137 = scmp.eq.s32.totalorder %s27, 0
      %p138 = por %p136, %p137
      %s140 = sadd.s32 %s139, 1
      %p143 = scmp.eq.s32.totalorder %s21, 3
      %p144 = scmp.ne.s32.totalorder %s139, %s141
      %p145 = scmp.eq.s32.totalorder %s21, 0
      %p146 = por %p144, %p145
      %p147 = scmp.ne.s32.totalorder %s139, %s141
      %p148 = scmp.eq.s32.totalorder %s26, 3
      %p149 = por %p147, %p148
      %p150 = scmp.ne.s32.totalorder %s141, %s142
      %p151 = scmp.eq.s32.totalorder %s26, 0
      %p152 = por %p150, %p151
      %p153 = scmp.ne.s32.totalorder %s141, %s142
      %p154 = scmp.eq.s32.totalorder %s27, 3
      %p155 = por %p153, %p154
      %p157 = scmp.ne.s32.totalorder %s142, %s156
      %p158 = scmp.eq.s32.totalorder %s27, 0
      %p159 = por %p157, %p158
      %s161 = sadd.s32 %s160, 1
      %p164 = scmp.eq.s32.totalorder %s21, 3
      %p165 = scmp.ne.s32.totalorder %s160, %s162
      %p166 = scmp.eq.s32.totalorder %s21, 0
      %p167 = por %p165, %p166
      %p168 = scmp.ne.s32.totalorder %s160, %s162
      %p169 = scmp.eq.s32.totalorder %s26, 3
      %p170 = por %p168, %p169
      %p171 = scmp.ne.s32.totalorder %s162, %s163
      %p172 = scmp.eq.s32.totalorder %s26, 0
      %p173 = por %p171, %p172
      %p174 = scmp.ne.s32.totalorder %s162, %s163
      %p175 = scmp.eq.s32.totalorder %s27, 3
      %p176 = por %p174, %p175
      %p178 = scmp.ne.s32.totalorder %s163, %s177
      %p179 = scmp.eq.s32.totalorder %s27, 0
      %p180 = por %p178, %p179
      %s181 = ssub.s32 %s21, %s28
      %p182 = scmp.eq.s32.totalorder %s181, 0
      %s184 = sadd.s32 %s183, 1
      %s185 = scalar_select %p182, %s183, %s184
      %p188 = pneg %p182
      %p189 = scmp.eq.s32.totalorder %s21, 3
      %p190 = por %p188, %p189
      %p191 = scmp.ne.s32.totalorder %s183, %s186
      %p192 = scmp.eq.s32.totalorder %s21, 0
      %p193 = por %p191, %p192
      %p194 = scmp.ne.s32.totalorder %s183, %s186
      %p195 = scmp.eq.s32.totalorder %s26, 3
      %p196 = por %p194, %p195
      %p197 = scmp.ne.s32.totalorder %s186, %s187
      %p198 = scmp.eq.s32.totalorder %s26, 0
      %p199 = por %p197, %p198
      %p200 = scmp.ne.s32.totalorder %s186, %s187
      %p201 = scmp.eq.s32.totalorder %s27, 3
      %p202 = por %p200, %p201
      %p204 = scmp.ne.s32.totalorder %s187, %s203
      %p205 = scmp.eq.s32.totalorder %s27, 0
      %p206 = por %p204, %p205
      %p207 = scmp.le.s32.totalorder 1, %s21
      %p208 = scmp.lt.s32.totalorder %s21, 5
      %p209 = pnand %p207, %p208
      %p210 = pneg %p209
      // Predicated region
      $region9: #{tpu_custom_call.1} parent=5 // pred_check
        _
      $region10: #{tpu_custom_call.1} parent=5 // pred_check_branch
        %212 = sbr.rel (%p209) target = $region12
      $region11: #{tpu_custom_call.1} parent=5 // pred_region
        %s213 = ssub.s32 %s21, 1
        // Predicated region
        $region13: #{tpu_custom_call.1} parent=11 // pred_check
          %p214 = pneg %p68
        $region14: #{tpu_custom_call.1} parent=11 // pred_check_branch
          %216 = sbr.rel (%p214) target = $region16
        $region15: #{tpu_custom_call.1} parent=11 // pred_region
          %s218 = ssub.s32 2048, 2048
          %219 = vsyncadd [#allocation6], %s218
          %s220 = sshll.u32 [#allocation5], 4
          %s221 = int_to_ptr.vmem [resolvable:$true] %s220
          %226 = dma.hbm_to_vmem [thread:$0]  %s1, 2048, %s221, [#allocation6], 128, 128, 8
        $region16: #{tpu_custom_call.1} parent=11 // pred_fallthru
          _
        // Predicated region
        $region17: #{tpu_custom_call.1} parent=11 // pred_check
          %p227 = pneg %p89
        $region18: #{tpu_custom_call.1} parent=11 // pred_check_branch
          %229 = sbr.rel (%p227) target = $region20
        $region19: #{tpu_custom_call.1} parent=11 // pred_region
          %s231 = ssub.s32 2048, 2048
          %232 = vsyncadd [#allocation6], %s231
          %s233 = sshll.u32 [#allocation7], 4
          %s234 = int_to_ptr.vmem [resolvable:$true] %s233
          %239 = dma.hbm_to_vmem [thread:$0]  %s2, 2048, %s234, [#allocation6], 128, 128, 8
        $region20: #{tpu_custom_call.1} parent=11 // pred_fallthru
          _
        // Predicated region
        $region21: #{tpu_custom_call.1} parent=11 // pred_check
          %p240 = pneg %p110
        $region22: #{tpu_custom_call.1} parent=11 // pred_check_branch
          %242 = sbr.rel (%p240) target = $region24
        $region23: #{tpu_custom_call.1} parent=11 // pred_region
          %s244 = ssub.s32 2048, 2048
          %245 = vsyncadd [#allocation9], %s244
          %s246 = sshll.u32 [#allocation8], 4
          %s247 = int_to_ptr.vmem [resolvable:$true] %s246
          %252 = dma.hbm_to_vmem [thread:$0]  %s3, 2048, %s247, [#allocation9], 128, 128, 8
        $region24: #{tpu_custom_call.1} parent=11 // pred_fallthru
          _
        // Predicated region
        $region25: #{tpu_custom_call.1} parent=11 // pred_check
          %p253 = pneg %p131
        $region26: #{tpu_custom_call.1} parent=11 // pred_check_branch
          %255 = sbr.rel (%p253) target = $region28
        $region27: #{tpu_custom_call.1} parent=11 // pred_region
          %s257 = ssub.s32 2048, 2048
          %258 = vsyncadd [#allocation9], %s257
          %s259 = sshll.u32 [#allocation10], 4
          %s260 = int_to_ptr.vmem [resolvable:$true] %s259
          %265 = dma.hbm_to_vmem [thread:$0]  %s4, 2048, %s260, [#allocation9], 128, 128, 8
        $region28: #{tpu_custom_call.1} parent=11 // pred_fallthru
          _
        // Predicated region
        $region29: #{tpu_custom_call.1} parent=11 // pred_check
          %p266 = pneg %p152
        $region30: #{tpu_custom_call.1} parent=11 // pred_check_branch
          %268 = sbr.rel (%p266) target = $region32
        $region31: #{tpu_custom_call.1} parent=11 // pred_region
          _
        $region32: #{tpu_custom_call.1} parent=11 // pred_fallthru
          _
        // Predicated region
        $region33: #{tpu_custom_call.1} parent=11 // pred_check
          %p269 = pneg %p173
        $region34: #{tpu_custom_call.1} parent=11 // pred_check_branch
          %271 = sbr.rel (%p269) target = $region36
        $region35: #{tpu_custom_call.1} parent=11 // pred_region
          _
        $region36: #{tpu_custom_call.1} parent=11 // pred_fallthru
          _
      $region12: #{tpu_custom_call.1} parent=5 // pred_fallthru
        _
      %p272 = scmp.lt.s32.totalorder %s21, 4
      // Predicated region
      $region37: #{tpu_custom_call.1} parent=5 // pred_check
        %p273 = pneg %p272
      $region38: #{tpu_custom_call.1} parent=5 // pred_check_branch
        %275 = sbr.rel (%p273) target = $region40
      $region39: #{tpu_custom_call.1} parent=5 // pred_region
        // Predicated region
        $region41: #{tpu_custom_call.1} parent=39 // pred_check
          %p276 = pneg %p41
        $region42: #{tpu_custom_call.1} parent=39 // pred_check_branch
          %278 = sbr.rel (%p276) target = $region44
        $region43: #{tpu_custom_call.1} parent=39 // pred_region
          %s279 = sand.u32 %s31, 1
          %s280 = scalar_lea.sflag [#allocation3], %s279
          %s281 = sand.u32 %s31, 1
          %s282 = smul.addr %s281, 64
          %s283 = scalar_lea.vmem [#allocation2], %s282
          %s284 = smul.u32 8, %s21
          %s286 = ssub.s32 1024, 1024
          %287 = vsyncadd %s280, %s286
          %s288 = smul.addr %s284, 128
          %s289 = scalar_lea.hbm %s0, %s288
          %s290 = sshll.u32 %s283, 4
          %s291 = int_to_ptr.vmem [resolvable:$true] %s290
          %296 = dma.hbm_to_vmem [thread:$0]  %s289, 1024, %s291, %s280, 128, 128, 8
        $region44: #{tpu_custom_call.1} parent=39 // pred_fallthru
          _
      $region40: #{tpu_custom_call.1} parent=5 // pred_fallthru
        _
      %p297 = scmp.le.s32.totalorder 1, %s21
      %p298 = scmp.lt.s32.totalorder %s21, 5
      %p299 = pnand %p297, %p298
      %p300 = pneg %p299
      // Predicated region
      $region45: #{tpu_custom_call.1} parent=5 // pred_check
        _
      $region46: #{tpu_custom_call.1} parent=5 // pred_check_branch
        %302 = sbr.rel (%p299) target = $region48
      $region47: #{tpu_custom_call.1} parent=5 // pred_region
        %s303 = ssub.s32 %s21, 1
        %s304 = sand.u32 %s34, 1
        %s305 = scalar_lea.sflag [#allocation3], %s304
        %s306 = sand.u32 %s34, 1
        %s307 = smul.addr %s306, 64
        %s308 = scalar_lea.vmem [#allocation2], %s307
        // Predicated region
        $region49: #{tpu_custom_call.1} parent=47 // pred_check
          %p309 = pneg %p47
        $region50: #{tpu_custom_call.1} parent=47 // pred_check_branch
          %311 = sbr.rel (%p309) target = $region52
        $region51: #{tpu_custom_call.1} parent=47 // pred_region
          %312 = dma.done %s305, 1024
        $region52: #{tpu_custom_call.1} parent=47 // pred_fallthru
          _
        // Predicated region
        $region53: #{tpu_custom_call.1} parent=47 // pred_check
          %p313 = pneg %p68
        $region54: #{tpu_custom_call.1} parent=47 // pred_check_branch
          %315 = sbr.rel (%p313) target = $region56
        $region55: #{tpu_custom_call.1} parent=47 // pred_region
          %316 = dma.done [#allocation6], 2048
        $region56: #{tpu_custom_call.1} parent=47 // pred_fallthru
          _
        // Predicated region
        $region57: #{tpu_custom_call.1} parent=47 // pred_check
          %p317 = pneg %p89
        $region58: #{tpu_custom_call.1} parent=47 // pred_check_branch
          %319 = sbr.rel (%p317) target = $region60
        $region59: #{tpu_custom_call.1} parent=47 // pred_region
          %320 = dma.done [#allocation6], 2048
        $region60: #{tpu_custom_call.1} parent=47 // pred_fallthru
          _
        // Predicated region
        $region61: #{tpu_custom_call.1} parent=47 // pred_check
          %p321 = pneg %p110
        $region62: #{tpu_custom_call.1} parent=47 // pred_check_branch
          %323 = sbr.rel (%p321) target = $region64
        $region63: #{tpu_custom_call.1} parent=47 // pred_region
          %324 = dma.done [#allocation9], 2048
        $region64: #{tpu_custom_call.1} parent=47 // pred_fallthru
          _
        // Predicated region
        $region65: #{tpu_custom_call.1} parent=47 // pred_check
          %p325 = pneg %p131
        $region66: #{tpu_custom_call.1} parent=47 // pred_check_branch
          %327 = sbr.rel (%p325) target = $region68
        $region67: #{tpu_custom_call.1} parent=47 // pred_region
          %328 = dma.done [#allocation9], 2048
        $region68: #{tpu_custom_call.1} parent=47 // pred_fallthru
          _
        %s329 = sand.u32 %s34, 1
        %s330 = scalar_lea.sflag [#allocation3], %s329
        %s331 = sand.u32 %s34, 1
        %s332 = smul.addr %s331, 64
        %s333 = scalar_lea.vmem [#allocation2], %s332
        %p334 = pneg %p47
        %p335 = pneg %p44
        %p336 = pneg %p68
        %p337 = pneg %p65
        %p338 = pneg %p89
        %p339 = pneg %p86
        %p340 = pneg %p110
        %p341 = pneg %p107
        %p342 = pneg %p131
        %p343 = pneg %p128
        %p344 = pneg %p152
        %p345 = pneg %p149
        %p346 = pneg %p173
        %p347 = pneg %p170
        %p348 = pneg %p199
        %p349 = pneg %p196
        %s350 = sand.u32 %s186, 1
        %s351 = scalar_lea.sflag [#allocation4], %s350
        %s352 = sand.u32 %s186, 1
        %s353 = smul.addr %s352, 64
        %s354 = scalar_lea.vmem [#allocation11], %s353
        %s355 = smul.u32 8, %s26
        %s356 = smul.u32 8, %s26
        %v357 = vld [vmem:[%s308] sm:$0xff]
        %v358 = vld [vmem:[%s308 + $0x8] sm:$0xff]
        %v359 = vld [vmem:[%s308 + $0x10] sm:$0xff]
        %v360 = vld [vmem:[%s308 + $0x18] sm:$0xff]
        %v361 = vld [vmem:[%s308 + $0x20] sm:$0xff]
        %v362 = vld [vmem:[%s308 + $0x28] sm:$0xff]
        %v363 = vld [vmem:[%s308 + $0x30] sm:$0xff]
        %v364 = vld [vmem:[%s308 + $0x38] sm:$0xff]
        %v365 = vld [vmem:[#allocation5] sm:$0xff]
        %v366 = vld [vmem:[#allocation5 + $0x8] sm:$0xff]
        %v367 = vld [vmem:[#allocation5 + $0x10] sm:$0xff]
        %v368 = vld [vmem:[#allocation5 + $0x18] sm:$0xff]
        %v369 = vld [vmem:[#allocation5 + $0x20] sm:$0xff]
        %v370 = vld [vmem:[#allocation5 + $0x28] sm:$0xff]
        %v371 = vld [vmem:[#allocation5 + $0x30] sm:$0xff]
        %v372 = vld [vmem:[#allocation5 + $0x38] sm:$0xff]
        %v373 = vld [vmem:[#allocation5 + $0x40] sm:$0xff]
        %v374 = vld [vmem:[#allocation5 + $0x48] sm:$0xff]
        %v375 = vld [vmem:[#allocation5 + $0x50] sm:$0xff]
        %v376 = vld [vmem:[#allocation5 + $0x58] sm:$0xff]
        %v377 = vld [vmem:[#allocation5 + $0x60] sm:$0xff]
        %v378 = vld [vmem:[#allocation5 + $0x68] sm:$0xff]
        %v379 = vld [vmem:[#allocation5 + $0x70] sm:$0xff]
        %v380 = vld [vmem:[#allocation5 + $0x78] sm:$0xff]
        %v381 = vld [vmem:[%s5] sm:$0x1]
        %v382 = vlaneseq
        %v383 = vshrl.u32 %v382, 7
        %v384 = vsub.s32 0, %v383
        %v385 = vrot.slane %v381, %v384
        %386 = vmatprep.subr.mxu0 0.0
        %387 = vmatpush1.msra.mxu0 %v380
        %388 = vmatprep.subr.mxu0 0.0
        %389 = vmatpush1.msra.mxu0 %v379
        %390 = vmatprep.subr.mxu0 0.0
        %391 = vmatpush1.msra.mxu0 %v378
        %392 = vmatprep.subr.mxu0 0.0
        %393 = vmatpush1.msra.mxu0 %v377
        %394 = vmatprep.subr.mxu0 0.0
        %395 = vmatpush1.msra.mxu0 %v376
        %396 = vmatprep.subr.mxu0 0.0
        %397 = vmatpush1.msra.mxu0 %v375
        %398 = vmatprep.subr.mxu0 0.0
        %399 = vmatpush1.msra.mxu0 %v374
        %400 = vmatprep.subr.mxu0 0.0
        %401 = vmatpush1.msra.mxu0 %v373
        %402 = vmatprep.subr.mxu0 0.0
        %403 = vmatpush1.msra.mxu0 %v372
        %404 = vmatprep.subr.mxu0 0.0
        %405 = vmatpush1.msra.mxu0 %v371
        %406 = vmatprep.subr.mxu0 0.0
        %407 = vmatpush1.msra.mxu0 %v370
        %408 = vmatprep.subr.mxu0 0.0
        %409 = vmatpush1.msra.mxu0 %v369
        %410 = vmatprep.subr.mxu0 0.0
        %411 = vmatpush1.msra.mxu0 %v368
        %412 = vmatprep.subr.mxu0 0.0
        %413 = vmatpush1.msra.mxu0 %v367
        %414 = vmatprep.subr.mxu0 0.0
        %415 = vmatpush1.msra.mxu0 %v366
        %416 = vmatprep.subr.mxu0 0.0
        %417 = vmatpush1.msra.mxu0 %v365
        %418 = vmatprep.subr.mxu0 0.0
        %419 = vmatpush2.msra.mxu0 0.0
        %420 = vmatprep.subr.mxu0 0.0
        %421 = vmatpush2.msra.mxu0 0.0
        %422 = vmatprep.subr.mxu0 0.0
        %423 = vmatpush2.msra.mxu0 0.0
        %424 = vmatprep.subr.mxu0 0.0
        %425 = vmatpush2.msra.mxu0 0.0
        %426 = vmatprep.subr.mxu0 0.0
        %427 = vmatpush2.msra.mxu0 0.0
        %428 = vmatprep.subr.mxu0 0.0
        %429 = vmatpush2.msra.mxu0 0.0
        %430 = vmatprep.subr.mxu0 0.0
        %431 = vmatpush2.msra.mxu0 0.0
        %432 = vmatprep.subr.mxu0 0.0
        %433 = vmatpush2.msra.mxu0 0.0
        %434 = vmatprep.subr.mxu0 0.0
        %435 = vmatpush2.msra.mxu0 0.0
        %436 = vmatprep.subr.mxu0 0.0
        %437 = vmatpush2.msra.mxu0 0.0
        %438 = vmatprep.subr.mxu0 0.0
        %439 = vmatpush2.msra.mxu0 0.0
        %440 = vmatprep.subr.mxu0 0.0
        %441 = vmatpush2.msra.mxu0 0.0
        %442 = vmatprep.subr.mxu0 0.0
        %443 = vmatpush2.msra.mxu0 0.0
        %444 = vmatprep.subr.mxu0 0.0
        %445 = vmatpush2.msra.mxu0 0.0
        %446 = vmatprep.subr.mxu0 0.0
        %447 = vmatpush2.msra.mxu0 0.0
        %448 = vmatprep.subr.mxu0 0.0
        %449 = vmatpush2.msra.mxu0 0.0
        %450 = vmatprep.mubr.f32.mxu0 0.0
        %451 = vmatmul.mubr.f32.gmra.mxu0 %v357
        %v452 = vpop.f32.mrf.mxu0
        %v453 = vadd.f32 %v385, %v452
        %v454 = vpop.f32.mrf.mxu0
        %455 = vmatprep.mubr.f32.mxu0 0.0
        %456 = vmatmul.mubr.f32.gmra.mxu0 %v358
        %v457 = vpop.f32.mrf.mxu0
        %v458 = vadd.f32 %v385, %v457
        %v459 = vpop.f32.mrf.mxu0
        %460 = vmatprep.mubr.f32.mxu0 0.0
        %461 = vmatmul.mubr.f32.gmra.mxu0 %v359
        %v462 = vpop.f32.mrf.mxu0
        %v463 = vadd.f32 %v385, %v462
        %v464 = vpop.f32.mrf.mxu0
        %465 = vmatprep.mubr.f32.mxu0 0.0
        %466 = vmatmul.mubr.f32.gmra.mxu0 %v360
        %v467 = vpop.f32.mrf.mxu0
        %v468 = vadd.f32 %v385, %v467
        %v469 = vpop.f32.mrf.mxu0
        %470 = vmatprep.mubr.f32.mxu0 0.0
        %471 = vmatmul.mubr.f32.gmra.mxu0 %v361
        %v472 = vpop.f32.mrf.mxu0
        %v473 = vadd.f32 %v385, %v472
        %v474 = vpop.f32.mrf.mxu0
        %475 = vmatprep.mubr.f32.mxu0 0.0
        %476 = vmatmul.mubr.f32.gmra.mxu0 %v362
        %v477 = vpop.f32.mrf.mxu0
        %v478 = vadd.f32 %v385, %v477
        %v479 = vpop.f32.mrf.mxu0
        %480 = vmatprep.mubr.f32.mxu0 0.0
        %481 = vmatmul.mubr.f32.gmra.mxu0 %v363
        %v482 = vpop.f32.mrf.mxu0
        %v483 = vadd.f32 %v385, %v482
        %v484 = vpop.f32.mrf.mxu0
        %485 = vmatprep.mubr.f32.mxu0 0.0
        %486 = vmatmul.mubr.f32.gmra.mxu0 %v364
        %v487 = vpop.f32.mrf.mxu0
        %v488 = vadd.f32 %v385, %v487
        %v489 = vpop.f32.mrf.mxu0
        %490 = vdwg.mxu0
        %v491 = vtanh.pop %v453
        %v492 = vtanh.pop %v458
        %v493 = vtanh.pop %v463
        %v494 = vtanh.pop %v468
        %v495 = vtanh.pop %v473
        %v496 = vtanh.pop %v478
        %v497 = vtanh.pop %v483
        %v498 = vtanh.pop %v488
        %v499 = vld [vmem:[#allocation7] sm:$0xff]
        %v500 = vld [vmem:[#allocation7 + $0x8] sm:$0xff]
        %v501 = vld [vmem:[#allocation7 + $0x10] sm:$0xff]
        %v502 = vld [vmem:[#allocation7 + $0x18] sm:$0xff]
        %v503 = vld [vmem:[#allocation7 + $0x20] sm:$0xff]
        %v504 = vld [vmem:[#allocation7 + $0x28] sm:$0xff]
        %v505 = vld [vmem:[#allocation7 + $0x30] sm:$0xff]
        %v506 = vld [vmem:[#allocation7 + $0x38] sm:$0xff]
        %v507 = vld [vmem:[#allocation7 + $0x40] sm:$0xff]
        %v508 = vld [vmem:[#allocation7 + $0x48] sm:$0xff]
        %v509 = vld [vmem:[#allocation7 + $0x50] sm:$0xff]
        %v510 = vld [vmem:[#allocation7 + $0x58] sm:$0xff]
        %v511 = vld [vmem:[#allocation7 + $0x60] sm:$0xff]
        %v512 = vld [vmem:[#allocation7 + $0x68] sm:$0xff]
        %v513 = vld [vmem:[#allocation7 + $0x70] sm:$0xff]
        %v514 = vld [vmem:[#allocation7 + $0x78] sm:$0xff]
        %v515 = vld [vmem:[%s5 + $0x1] sm:$0x1]
        %v516 = vlaneseq
        %v517 = vshrl.u32 %v516, 7
        %v518 = vsub.s32 0, %v517
        %v519 = vrot.slane %v515, %v518
        %520 = vmatprep.subr.mxu0 0.0
        %521 = vmatpush1.msra.mxu0 %v514
        %522 = vmatprep.subr.mxu0 0.0
        %523 = vmatpush1.msra.mxu0 %v513
        %524 = vmatprep.subr.mxu0 0.0
        %525 = vmatpush1.msra.mxu0 %v512
        %526 = vmatprep.subr.mxu0 0.0
        %527 = vmatpush1.msra.mxu0 %v511
        %528 = vmatprep.subr.mxu0 0.0
        %529 = vmatpush1.msra.mxu0 %v510
        %530 = vmatprep.subr.mxu0 0.0
        %531 = vmatpush1.msra.mxu0 %v509
        %532 = vmatprep.subr.mxu0 0.0
        %533 = vmatpush1.msra.mxu0 %v508
        %534 = vmatprep.subr.mxu0 0.0
        %535 = vmatpush1.msra.mxu0 %v507
        %536 = vmatprep.subr.mxu0 0.0
        %537 = vmatpush1.msra.mxu0 %v506
        %538 = vmatprep.subr.mxu0 0.0
        %539 = vmatpush1.msra.mxu0 %v505
        %540 = vmatprep.subr.mxu0 0.0
        %541 = vmatpush1.msra.mxu0 %v504
        %542 = vmatprep.subr.mxu0 0.0
        %543 = vmatpush1.msra.mxu0 %v503
        %544 = vmatprep.subr.mxu0 0.0
        %545 = vmatpush1.msra.mxu0 %v502
        %546 = vmatprep.subr.mxu0 0.0
        %547 = vmatpush1.msra.mxu0 %v501
        %548 = vmatprep.subr.mxu0 0.0
        %549 = vmatpush1.msra.mxu0 %v500
        %550 = vmatprep.subr.mxu0 0.0
        %551 = vmatpush1.msra.mxu0 %v499
        %552 = vmatprep.subr.mxu0 0.0
        %553 = vmatpush2.msra.mxu0 0.0
        %554 = vmatprep.subr.mxu0 0.0
        %555 = vmatpush2.msra.mxu0 0.0
        %556 = vmatprep.subr.mxu0 0.0
        %557 = vmatpush2.msra.mxu0 0.0
        %558 = vmatprep.subr.mxu0 0.0
        %559 = vmatpush2.msra.mxu0 0.0
        %560 = vmatprep.subr.mxu0 0.0
        %561 = vmatpush2.msra.mxu0 0.0
        %562 = vmatprep.subr.mxu0 0.0
        %563 = vmatpush2.msra.mxu0 0.0
        %564 = vmatprep.subr.mxu0 0.0
        %565 = vmatpush2.msra.mxu0 0.0
        %566 = vmatprep.subr.mxu0 0.0
        %567 = vmatpush2.msra.mxu0 0.0
        %568 = vmatprep.subr.mxu0 0.0
        %569 = vmatpush2.msra.mxu0 0.0
        %570 = vmatprep.subr.mxu0 0.0
        %571 = vmatpush2.msra.mxu0 0.0
        %572 = vmatprep.subr.mxu0 0.0
        %573 = vmatpush2.msra.mxu0 0.0
        %574 = vmatprep.subr.mxu0 0.0
        %575 = vmatpush2.msra.mxu0 0.0
        %576 = vmatprep.subr.mxu0 0.0
        %577 = vmatpush2.msra.mxu0 0.0
        %578 = vmatprep.subr.mxu0 0.0
        %579 = vmatpush2.msra.mxu0 0.0
        %580 = vmatprep.subr.mxu0 0.0
        %581 = vmatpush2.msra.mxu0 0.0
        %582 = vmatprep.subr.mxu0 0.0
        %583 = vmatpush2.msra.mxu0 0.0
        %584 = vmatprep.mubr.f32.mxu0 0.0
        %585 = vmatmul.mubr.f32.gmra.mxu0 %v491
        %v586 = vpop.f32.mrf.mxu0
        %v587 = vadd.f32 %v519, %v586
        %v588 = vpop.f32.mrf.mxu0
        %589 = vmatprep.mubr.f32.mxu0 0.0
        %590 = vmatmul.mubr.f32.gmra.mxu0 %v492
        %v591 = vpop.f32.mrf.mxu0
        %v592 = vadd.f32 %v519, %v591
        %v593 = vpop.f32.mrf.mxu0
        %594 = vmatprep.mubr.f32.mxu0 0.0
        %595 = vmatmul.mubr.f32.gmra.mxu0 %v493
        %v596 = vpop.f32.mrf.mxu0
        %v597 = vadd.f32 %v519, %v596
        %v598 = vpop.f32.mrf.mxu0
        %599 = vmatprep.mubr.f32.mxu0 0.0
        %600 = vmatmul.mubr.f32.gmra.mxu0 %v494
        %v601 = vpop.f32.mrf.mxu0
        %v602 = vadd.f32 %v519, %v601
        %v603 = vpop.f32.mrf.mxu0
        %604 = vmatprep.mubr.f32.mxu0 0.0
        %605 = vmatmul.mubr.f32.gmra.mxu0 %v495
        %v606 = vpop.f32.mrf.mxu0
        %v607 = vadd.f32 %v519, %v606
        %v608 = vpop.f32.mrf.mxu0
        %609 = vmatprep.mubr.f32.mxu0 0.0
        %610 = vmatmul.mubr.f32.gmra.mxu0 %v496
        %v611 = vpop.f32.mrf.mxu0
        %v612 = vadd.f32 %v519, %v611
        %v613 = vpop.f32.mrf.mxu0
        %614 = vmatprep.mubr.f32.mxu0 0.0
        %615 = vmatmul.mubr.f32.gmra.mxu0 %v497
        %v616 = vpop.f32.mrf.mxu0
        %v617 = vadd.f32 %v519, %v616
        %v618 = vpop.f32.mrf.mxu0
        %619 = vmatprep.mubr.f32.mxu0 0.0
        %620 = vmatmul.mubr.f32.gmra.mxu0 %v498
        %v621 = vpop.f32.mrf.mxu0
        %v622 = vadd.f32 %v519, %v621
        %v623 = vpop.f32.mrf.mxu0
        %624 = vdwg.mxu0
        %v625 = vtanh.pop %v587
        %v626 = vtanh.pop %v592
        %v627 = vtanh.pop %v597
        %v628 = vtanh.pop %v602
        %v629 = vtanh.pop %v607
        %v630 = vtanh.pop %v612
        %v631 = vtanh.pop %v617
        %v632 = vtanh.pop %v622
        %v633 = vld [vmem:[#allocation8] sm:$0xff]
        %v634 = vld [vmem:[#allocation8 + $0x8] sm:$0xff]
        %v635 = vld [vmem:[#allocation8 + $0x10] sm:$0xff]
        %v636 = vld [vmem:[#allocation8 + $0x18] sm:$0xff]
        %v637 = vld [vmem:[#allocation8 + $0x20] sm:$0xff]
        %v638 = vld [vmem:[#allocation8 + $0x28] sm:$0xff]
        %v639 = vld [vmem:[#allocation8 + $0x30] sm:$0xff]
        %v640 = vld [vmem:[#allocation8 + $0x38] sm:$0xff]
        %v641 = vld [vmem:[#allocation8 + $0x40] sm:$0xff]
        %v642 = vld [vmem:[#allocation8 + $0x48] sm:$0xff]
        %v643 = vld [vmem:[#allocation8 + $0x50] sm:$0xff]
        %v644 = vld [vmem:[#allocation8 + $0x58] sm:$0xff]
        %v645 = vld [vmem:[#allocation8 + $0x60] sm:$0xff]
        %v646 = vld [vmem:[#allocation8 + $0x68] sm:$0xff]
        %v647 = vld [vmem:[#allocation8 + $0x70] sm:$0xff]
        %v648 = vld [vmem:[#allocation8 + $0x78] sm:$0xff]
        %v649 = vld [vmem:[%s5 + $0x2] sm:$0x1]
        %v650 = vlaneseq
        %v651 = vshrl.u32 %v650, 7
        %v652 = vsub.s32 0, %v651
        %v653 = vrot.slane %v649, %v652
        %654 = vmatprep.subr.mxu0 0.0
        %655 = vmatpush1.msra.mxu0 %v648
        %656 = vmatprep.subr.mxu0 0.0
        %657 = vmatpush1.msra.mxu0 %v647
        %658 = vmatprep.subr.mxu0 0.0
        %659 = vmatpush1.msra.mxu0 %v646
        %660 = vmatprep.subr.mxu0 0.0
        %661 = vmatpush1.msra.mxu0 %v645
        %662 = vmatprep.subr.mxu0 0.0
        %663 = vmatpush1.msra.mxu0 %v644
        %664 = vmatprep.subr.mxu0 0.0
        %665 = vmatpush1.msra.mxu0 %v643
        %666 = vmatprep.subr.mxu0 0.0
        %667 = vmatpush1.msra.mxu0 %v642
        %668 = vmatprep.subr.mxu0 0.0
        %669 = vmatpush1.msra.mxu0 %v641
        %670 = vmatprep.subr.mxu0 0.0
        %671 = vmatpush1.msra.mxu0 %v640
        %672 = vmatprep.subr.mxu0 0.0
        %673 = vmatpush1.msra.mxu0 %v639
        %674 = vmatprep.subr.mxu0 0.0
        %675 = vmatpush1.msra.mxu0 %v638
        %676 = vmatprep.subr.mxu0 0.0
        %677 = vmatpush1.msra.mxu0 %v637
        %678 = vmatprep.subr.mxu0 0.0
        %679 = vmatpush1.msra.mxu0 %v636
        %680 = vmatprep.subr.mxu0 0.0
        %681 = vmatpush1.msra.mxu0 %v635
        %682 = vmatprep.subr.mxu0 0.0
        %683 = vmatpush1.msra.mxu0 %v634
        %684 = vmatprep.subr.mxu0 0.0
        %685 = vmatpush1.msra.mxu0 %v633
        %686 = vmatprep.subr.mxu0 0.0
        %687 = vmatpush2.msra.mxu0 0.0
        %688 = vmatprep.subr.mxu0 0.0
        %689 = vmatpush2.msra.mxu0 0.0
        %690 = vmatprep.subr.mxu0 0.0
        %691 = vmatpush2.msra.mxu0 0.0
        %692 = vmatprep.subr.mxu0 0.0
        %693 = vmatpush2.msra.mxu0 0.0
        %694 = vmatprep.subr.mxu0 0.0
        %695 = vmatpush2.msra.mxu0 0.0
        %696 = vmatprep.subr.mxu0 0.0
        %697 = vmatpush2.msra.mxu0 0.0
        %698 = vmatprep.subr.mxu0 0.0
        %699 = vmatpush2.msra.mxu0 0.0
        %700 = vmatprep.subr.mxu0 0.0
        %701 = vmatpush2.msra.mxu0 0.0
        %702 = vmatprep.subr.mxu0 0.0
        %703 = vmatpush2.msra.mxu0 0.0
        %704 = vmatprep.subr.mxu0 0.0
        %705 = vmatpush2.msra.mxu0 0.0
        %706 = vmatprep.subr.mxu0 0.0
        %707 = vmatpush2.msra.mxu0 0.0
        %708 = vmatprep.subr.mxu0 0.0
        %709 = vmatpush2.msra.mxu0 0.0
        %710 = vmatprep.subr.mxu0 0.0
        %711 = vmatpush2.msra.mxu0 0.0
        %712 = vmatprep.subr.mxu0 0.0
        %713 = vmatpush2.msra.mxu0 0.0
        %714 = vmatprep.subr.mxu0 0.0
        %715 = vmatpush2.msra.mxu0 0.0
        %716 = vmatprep.subr.mxu0 0.0
        %717 = vmatpush2.msra.mxu0 0.0
        %718 = vmatprep.mubr.f32.mxu0 0.0
        %719 = vmatmul.mubr.f32.gmra.mxu0 %v625
        %v720 = vpop.f32.mrf.mxu0
        %v721 = vadd.f32 %v653, %v720
        %v722 = vpop.f32.mrf.mxu0
        %723 = vmatprep.mubr.f32.mxu0 0.0
        %724 = vmatmul.mubr.f32.gmra.mxu0 %v626
        %v725 = vpop.f32.mrf.mxu0
        %v726 = vadd.f32 %v653, %v725
        %v727 = vpop.f32.mrf.mxu0
        %728 = vmatprep.mubr.f32.mxu0 0.0
        %729 = vmatmul.mubr.f32.gmra.mxu0 %v627
        %v730 = vpop.f32.mrf.mxu0
        %v731 = vadd.f32 %v653, %v730
        %v732 = vpop.f32.mrf.mxu0
        %733 = vmatprep.mubr.f32.mxu0 0.0
        %734 = vmatmul.mubr.f32.gmra.mxu0 %v628
        %v735 = vpop.f32.mrf.mxu0
        %v736 = vadd.f32 %v653, %v735
        %v737 = vpop.f32.mrf.mxu0
        %738 = vmatprep.mubr.f32.mxu0 0.0
        %739 = vmatmul.mubr.f32.gmra.mxu0 %v629
        %v740 = vpop.f32.mrf.mxu0
        %v741 = vadd.f32 %v653, %v740
        %v742 = vpop.f32.mrf.mxu0
        %743 = vmatprep.mubr.f32.mxu0 0.0
        %744 = vmatmul.mubr.f32.gmra.mxu0 %v630
        %v745 = vpop.f32.mrf.mxu0
        %v746 = vadd.f32 %v653, %v745
        %v747 = vpop.f32.mrf.mxu0
        %748 = vmatprep.mubr.f32.mxu0 0.0
        %749 = vmatmul.mubr.f32.gmra.mxu0 %v631
        %v750 = vpop.f32.mrf.mxu0
        %v751 = vadd.f32 %v653, %v750
        %v752 = vpop.f32.mrf.mxu0
        %753 = vmatprep.mubr.f32.mxu0 0.0
        %754 = vmatmul.mubr.f32.gmra.mxu0 %v632
        %v755 = vpop.f32.mrf.mxu0
        %v756 = vadd.f32 %v653, %v755
        %v757 = vpop.f32.mrf.mxu0
        %758 = vdwg.mxu0
        %v759 = vtanh.pop %v721
        %v760 = vtanh.pop %v726
        %v761 = vtanh.pop %v731
        %v762 = vtanh.pop %v736
        %v763 = vtanh.pop %v741
        %v764 = vtanh.pop %v746
        %v765 = vtanh.pop %v751
        %v766 = vtanh.pop %v756
        %v767 = vld [vmem:[#allocation10] sm:$0xff]
        %v768 = vld [vmem:[#allocation10 + $0x8] sm:$0xff]
        %v769 = vld [vmem:[#allocation10 + $0x10] sm:$0xff]
        %v770 = vld [vmem:[#allocation10 + $0x18] sm:$0xff]
        %v771 = vld [vmem:[#allocation10 + $0x20] sm:$0xff]
        %v772 = vld [vmem:[#allocation10 + $0x28] sm:$0xff]
        %v773 = vld [vmem:[#allocation10 + $0x30] sm:$0xff]
        %v774 = vld [vmem:[#allocation10 + $0x38] sm:$0xff]
        %v775 = vld [vmem:[#allocation10 + $0x40] sm:$0xff]
        %v776 = vld [vmem:[#allocation10 + $0x48] sm:$0xff]
        %v777 = vld [vmem:[#allocation10 + $0x50] sm:$0xff]
        %v778 = vld [vmem:[#allocation10 + $0x58] sm:$0xff]
        %v779 = vld [vmem:[#allocation10 + $0x60] sm:$0xff]
        %v780 = vld [vmem:[#allocation10 + $0x68] sm:$0xff]
        %v781 = vld [vmem:[#allocation10 + $0x70] sm:$0xff]
        %v782 = vld [vmem:[#allocation10 + $0x78] sm:$0xff]
        %v783 = vld [vmem:[%s6] sm:$0x1]
        %v785 = vlaneseq
        %v786 = vshrl.u32 %v785, 7
        %v787 = vsub.s32 0, %v786
        %v788 = vrot.slane %v783, %v787
        %790 = vmatprep.subr.mxu0 0.0
        %791 = vmatpush1.msra.mxu0 %v782
        %792 = vmatprep.subr.mxu0 0.0
        %793 = vmatpush1.msra.mxu0 %v781
        %794 = vmatprep.subr.mxu0 0.0
        %795 = vmatpush1.msra.mxu0 %v780
        %796 = vmatprep.subr.mxu0 0.0
        %797 = vmatpush1.msra.mxu0 %v779
        %798 = vmatprep.subr.mxu0 0.0
        %799 = vmatpush1.msra.mxu0 %v778
        %800 = vmatprep.subr.mxu0 0.0
        %801 = vmatpush1.msra.mxu0 %v777
        %802 = vmatprep.subr.mxu0 0.0
        %803 = vmatpush1.msra.mxu0 %v776
        %804 = vmatprep.subr.mxu0 0.0
        %805 = vmatpush1.msra.mxu0 %v775
        %806 = vmatprep.subr.mxu0 0.0
        %807 = vmatpush1.msra.mxu0 %v774
        %808 = vmatprep.subr.mxu0 0.0
        %809 = vmatpush1.msra.mxu0 %v773
        %810 = vmatprep.subr.mxu0 0.0
        %811 = vmatpush1.msra.mxu0 %v772
        %812 = vmatprep.subr.mxu0 0.0
        %813 = vmatpush1.msra.mxu0 %v771
        %814 = vmatprep.subr.mxu0 0.0
        %815 = vmatpush1.msra.mxu0 %v770
        %816 = vmatprep.subr.mxu0 0.0
        %817 = vmatpush1.msra.mxu0 %v769
        %818 = vmatprep.subr.mxu0 0.0
        %819 = vmatpush1.msra.mxu0 %v768
        %820 = vmatprep.subr.mxu0 0.0
        %821 = vmatpush1.msra.mxu0 %v767
        %822 = vmatprep.subr.mxu0 0.0
        %823 = vmatpush2.msra.mxu0 0.0
        %824 = vmatprep.subr.mxu0 0.0
        %825 = vmatpush2.msra.mxu0 0.0
        %826 = vmatprep.subr.mxu0 0.0
        %827 = vmatpush2.msra.mxu0 0.0
        %828 = vmatprep.subr.mxu0 0.0
        %829 = vmatpush2.msra.mxu0 0.0
        %830 = vmatprep.subr.mxu0 0.0
        %831 = vmatpush2.msra.mxu0 0.0
        %832 = vmatprep.subr.mxu0 0.0
        %833 = vmatpush2.msra.mxu0 0.0
        %834 = vmatprep.subr.mxu0 0.0
        %835 = vmatpush2.msra.mxu0 0.0
        %836 = vmatprep.subr.mxu0 0.0
        %837 = vmatpush2.msra.mxu0 0.0
        %838 = vmatprep.subr.mxu0 0.0
        %839 = vmatpush2.msra.mxu0 0.0
        %840 = vmatprep.subr.mxu0 0.0
        %841 = vmatpush2.msra.mxu0 0.0
        %842 = vmatprep.subr.mxu0 0.0
        %843 = vmatpush2.msra.mxu0 0.0
        %844 = vmatprep.subr.mxu0 0.0
        %845 = vmatpush2.msra.mxu0 0.0
        %846 = vmatprep.subr.mxu0 0.0
        %847 = vmatpush2.msra.mxu0 0.0
        %848 = vmatprep.subr.mxu0 0.0
        %849 = vmatpush2.msra.mxu0 0.0
        %850 = vmatprep.subr.mxu0 0.0
        %851 = vmatpush2.msra.mxu0 0.0
        %852 = vmatprep.subr.mxu0 0.0
        %853 = vmatpush2.msra.mxu0 0.0
        %854 = vmatprep.mubr.f32.mxu0 0.0
        %855 = vmatmul.mubr.f32.gmra.mxu0 %v759
        %v856 = vpop.f32.mrf.mxu0
        %v857 = vadd.f32 %v788, %v856
        %v858 = vpop.f32.mrf.mxu0
        %859 = vmatprep.mubr.f32.mxu0 0.0
        %860 = vmatmul.mubr.f32.gmra.mxu0 %v760
        %v861 = vpop.f32.mrf.mxu0
        %v862 = vadd.f32 %v788, %v861
        %v863 = vpop.f32.mrf.mxu0
        %864 = vmatprep.mubr.f32.mxu0 0.0
        %865 = vmatmul.mubr.f32.gmra.mxu0 %v761
        %v866 = vpop.f32.mrf.mxu0
        %v867 = vadd.f32 %v788, %v866
        %v868 = vpop.f32.mrf.mxu0
        %869 = vmatprep.mubr.f32.mxu0 0.0
        %870 = vmatmul.mubr.f32.gmra.mxu0 %v762
        %v871 = vpop.f32.mrf.mxu0
        %v872 = vadd.f32 %v788, %v871
        %v873 = vpop.f32.mrf.mxu0
        %874 = vmatprep.mubr.f32.mxu0 0.0
        %875 = vmatmul.mubr.f32.gmra.mxu0 %v763
        %v876 = vpop.f32.mrf.mxu0
        %v877 = vadd.f32 %v788, %v876
        %v878 = vpop.f32.mrf.mxu0
        %879 = vmatprep.mubr.f32.mxu0 0.0
        %880 = vmatmul.mubr.f32.gmra.mxu0 %v764
        %v881 = vpop.f32.mrf.mxu0
        %v882 = vadd.f32 %v788, %v881
        %v883 = vpop.f32.mrf.mxu0
        %884 = vmatprep.mubr.f32.mxu0 0.0
        %885 = vmatmul.mubr.f32.gmra.mxu0 %v765
        %v886 = vpop.f32.mrf.mxu0
        %v887 = vadd.f32 %v788, %v886
        %v888 = vpop.f32.mrf.mxu0
        %889 = vmatprep.mubr.f32.mxu0 0.0
        %890 = vmatmul.mubr.f32.gmra.mxu0 %v766
        %v891 = vpop.f32.mrf.mxu0
        %v892 = vadd.f32 %v788, %v891
        %v893 = vpop.f32.mrf.mxu0
        %894 = vdwg.mxu0
        %895 = vmax.xlane.f32.xlu0 %v857
        %v896 = vpop.xlane.xlu0 %895
        %897 = vmax.xlane.f32.xlu0 %v862
        %v898 = vpop.xlane.xlu0 %897
        %899 = vmax.xlane.f32.xlu0 %v867
        %v900 = vpop.xlane.xlu0 %899
        %901 = vmax.xlane.f32.xlu0 %v872
        %v902 = vpop.xlane.xlu0 %901
        %903 = vmax.xlane.f32.xlu0 %v877
        %v904 = vpop.xlane.xlu0 %903
        %905 = vmax.xlane.f32.xlu0 %v882
        %v906 = vpop.xlane.xlu0 %905
        %907 = vmax.xlane.f32.xlu0 %v887
        %v908 = vpop.xlane.xlu0 %907
        %909 = vmax.xlane.f32.xlu0 %v892
        %v910 = vpop.xlane.xlu0 %909
        %v911 = vsub.f32 %v857, %v896
        %v912 = vsub.f32 %v862, %v898
        %v913 = vsub.f32 %v867, %v900
        %v914 = vsub.f32 %v872, %v902
        %v915 = vsub.f32 %v877, %v904
        %v916 = vsub.f32 %v882, %v906
        %v917 = vsub.f32 %v887, %v908
        %v918 = vsub.f32 %v892, %v910
        %v919 = vmul.f32 %v911, 1.442695
        %v920 = vpow.pop %v919
        %v921 = vmul.f32 %v912, 1.442695
        %v922 = vpow.pop %v921
        %v923 = vmul.f32 %v913, 1.442695
        %v924 = vpow.pop %v923
        %v925 = vmul.f32 %v914, 1.442695
        %v926 = vpow.pop %v925
        %v927 = vmul.f32 %v915, 1.442695
        %v928 = vpow.pop %v927
        %v929 = vmul.f32 %v916, 1.442695
        %v930 = vpow.pop %v929
        %v931 = vmul.f32 %v917, 1.442695
        %v932 = vpow.pop %v931
        %v933 = vmul.f32 %v918, 1.442695
        %v934 = vpow.pop %v933
        %935 = vadd.xlane.f32.xlu0 %v920
        %v936 = vpop.xlane.xlu0 %935
        %937 = vadd.xlane.f32.xlu0 %v922
        %v938 = vpop.xlane.xlu0 %937
        %939 = vadd.xlane.f32.xlu0 %v924
        %v940 = vpop.xlane.xlu0 %939
        %941 = vadd.xlane.f32.xlu0 %v926
        %v942 = vpop.xlane.xlu0 %941
        %943 = vadd.xlane.f32.xlu0 %v928
        %v944 = vpop.xlane.xlu0 %943
        %945 = vadd.xlane.f32.xlu0 %v930
        %v946 = vpop.xlane.xlu0 %945
        %947 = vadd.xlane.f32.xlu0 %v932
        %v948 = vpop.xlane.xlu0 %947
        %949 = vadd.xlane.f32.xlu0 %v934
        %v950 = vpop.xlane.xlu0 %949
        %v951 = vrcp.pop %v936
        %v952 = vrcp.pop %v938
        %v953 = vrcp.pop %v940
        %v954 = vrcp.pop %v942
        %v955 = vrcp.pop %v944
        %v956 = vrcp.pop %v946
        %v957 = vrcp.pop %v948
        %v958 = vrcp.pop %v950
        %v959 = vmul.f32 %v920, %v951
        %v960 = vmul.f32 %v922, %v952
        %v961 = vmul.f32 %v924, %v953
        %v962 = vmul.f32 %v926, %v954
        %v963 = vmul.f32 %v928, %v955
        %v964 = vmul.f32 %v930, %v956
        %v965 = vmul.f32 %v932, %v957
        %v966 = vmul.f32 %v934, %v958
        %967 = vst [vmem:[%s354] sm:$0xff] %v959
        %968 = vst [vmem:[%s354 + $0x8] sm:$0xff] %v960
        %969 = vst [vmem:[%s354 + $0x10] sm:$0xff] %v961
        %970 = vst [vmem:[%s354 + $0x18] sm:$0xff] %v962
        %971 = vst [vmem:[%s354 + $0x20] sm:$0xff] %v963
        %972 = vst [vmem:[%s354 + $0x28] sm:$0xff] %v964
        %973 = vst [vmem:[%s354 + $0x30] sm:$0xff] %v965
        %974 = vst [vmem:[%s354 + $0x38] sm:$0xff] %v966
        %s975 = sand.u32 %s186, 1
        %s976 = scalar_lea.sflag [#allocation4], %s975
        %s977 = sand.u32 %s186, 1
        %s978 = smul.addr %s977, 64
        %s979 = scalar_lea.vmem [#allocation11], %s978
        // Predicated region
        $region69: #{tpu_custom_call.1} parent=47 // pred_check
          %p980 = pneg %p196
        $region70: #{tpu_custom_call.1} parent=47 // pred_check_branch
          %982 = sbr.rel (%p980) target = $region72
        $region71: #{tpu_custom_call.1} parent=47 // pred_region
          %s983 = smul.u32 8, %s26
          %s985 = ssub.s32 1024, 1024
          %986 = vsyncadd %s976, %s985
          %s987 = smul.addr %s983, 128
          %s988 = scalar_lea.hbm %s7, %s987
          %s989 = sshll.u32 %s979, 4
          %s990 = int_to_ptr.vmem [resolvable:$true] %s989
          %995 = dma.vmem_to_hbm [thread:$0]  %s990, 1024, %s988, %s976, 128, 128, 8
        $region72: #{tpu_custom_call.1} parent=47 // pred_fallthru
          _
      $region48: #{tpu_custom_call.1} parent=5 // pred_fallthru
        _
      %p996 = scmp.le.s32.totalorder 2, %s21
      // Predicated region
      $region73: #{tpu_custom_call.1} parent=5 // pred_check
        %p997 = pneg %p996
      $region74: #{tpu_custom_call.1} parent=5 // pred_check_branch
        %999 = sbr.rel (%p997) target = $region76
      $region75: #{tpu_custom_call.1} parent=5 // pred_region
        %s1000 = ssub.s32 %s21, 2
        // Predicated region
        $region77: #{tpu_custom_call.1} parent=75 // pred_check
          %p1001 = pneg %p202
        $region78: #{tpu_custom_call.1} parent=75 // pred_check_branch
          %1003 = sbr.rel (%p1001) target = $region80
        $region79: #{tpu_custom_call.1} parent=75 // pred_region
          %s1004 = sand.u32 %s187, 1
          %s1005 = scalar_lea.sflag [#allocation4], %s1004
          %s1006 = sand.u32 %s187, 1
          %s1007 = smul.addr %s1006, 64
          %s1008 = scalar_lea.vmem [#allocation11], %s1007
          %1009 = dma.done %s1005, 1024
        $region80: #{tpu_custom_call.1} parent=75 // pred_fallthru
          _
      $region76: #{tpu_custom_call.1} parent=5 // pred_fallthru
        _
    $region6: #{tpu_custom_call.1} parent=1 // loop_footer
      %s25 = sadd.s32 1, %s21
    $region7: #{tpu_custom_call.1} parent=1 // loop_footer_branch
      %20 = sbr.rel target = $region3
    $region8: #{tpu_custom_call.1} parent=1 // loop_exit
      _
    %1010 = vsyncpa [#allocation3], 1
    %s1011 = scalar_lea.sflag [#allocation3], 1
    %1012 = vsyncpa %s1011, 1
    %1013 = vsyncpa [#allocation6], 1
    %1014 = vsyncpa [#allocation9], 1
    %1015 = vsyncpa [#allocation4], 1
    %s1016 = scalar_lea.sflag [#allocation4], 1
    %1017 = vsyncpa %s1016, 1

</llo_original>
